<compile_context>
chip_gen: v6e
topology: v6e:2x2x1
jax: 0.10.0
libtpu: 0.0.40
codegen_flags: <defaults>
</compile_context>

<pallas_src>
import functools

import jax
import jax.numpy as jnp
from jax import lax
from jax.experimental import pallas as pl
from jax.experimental.pallas import tpu as pltpu


def _round_up(x, m):
    return (x + m - 1) // m * m


def _patch_embed_kernel_single(x_ref, w_ref, b_ref, o_ref):
    """Full-K path: one MXU pass per M tile, result written directly to the output.

    x_ref: (tm, K)      activation patches (lane-dense in K)
    w_ref: (E_pad, K)   projection weight kept as (E, K) => K on lanes (resident)
    b_ref: (1, E_pad)   bias (zero-padded), f32
    o_ref: (tm, E_pad)  output block (lane-dense, >= 128 wide)
    """
    acc = lax.dot_general(
        x_ref[...], w_ref[...],
        dimension_numbers=(((1,), (1,)), ((), ())),  # contract K with K (trans_b)
        preferred_element_type=jnp.float32,
    )
    o_ref[...] = (acc + b_ref[...].astype(jnp.float32)).astype(o_ref.dtype)


def _patch_embed_kernel_splitk(x_ref, w_ref, b_ref, o_ref, acc_ref):
    """Split-K path: f32 accumulator carried across the trailing K grid axis."""
    k = pl.program_id(1)

    @pl.when(k == 0)
    def _():
        acc_ref[...] = jnp.zeros_like(acc_ref)

    acc_ref[...] += lax.dot_general(
        x_ref[...], w_ref[...],
        dimension_numbers=(((1,), (1,)), ((), ())),
        preferred_element_type=jnp.float32,
    )

    @pl.when(k == pl.num_programs(1) - 1)
    def _():
        o_ref[...] = (acc_ref[...] + b_ref[...].astype(jnp.float32)).astype(o_ref.dtype)


def _choose_tiles(M, K, E_pad, itemsize, budget_bytes):
    """Pick (tm, tk) so the double-buffered working set stays under budget_bytes."""
    # 512 is a multiple of 256 (v6e/v7x MXU width) and 128 (v5e MXU width); if M is
    # smaller, a full-extent M block is always legal regardless of divisibility.
    tm = M if M <= 512 else 512

    def fits(tk):
        act = 2 * tm * tk * itemsize        # double-buffered activation tile
        wgt = 2 * E_pad * tk * itemsize     # weight tile (budget 2 bufs)
        outb = 2 * tm * E_pad * 4           # double-buffered output tile
        acc = tm * E_pad * 4                # f32 accumulator scratch (split-K only)
        return act + wgt + outb + acc <= budget_bytes

    if fits(K):
        return tm, K  # full-K fast path: weight DMA'd once, no accumulator
    # Largest multiple of 128 that divides K and fits (exact division keeps the
    # K reduction free of padded garbage).
    best = None
    c = 128
    while c < K:
        if K % c == 0 and fits(c):
            best = c
        c += 128
    if best is None:
        best = K  # no suitable divisor; keep full K (vmem_limit has headroom)
    return tm, best


@functools.partial(
    jax.jit, static_argnames=("patch_size", "compute_dtype", "vmem_budget_bytes"))
def patch_embedding_forward(x, weight, bias, patch_size, *, compute_dtype=None,
                            vmem_budget_bytes=40 * 1024 * 1024):
    """Equivalent of Conv3d(C, E, kernel=stride=p)(x).flatten(2).transpose(1, 2).

    x:      (B, C, D, H, W)
    weight: (E, C, p, p, p)   (torch Conv3d layout)
    bias:   (E,)
    Returns (B, n_patch, E) with n_patch = (D//p)*(H//p)*(W//p).
    """
    p = patch_size
    B, C, D, H, W = x.shape
    E = weight.shape[0]
    nd, nh, nw = D // p, H // p, W // p
    n_patch = nd * nh * nw
    K = C * p * p * p
    M = B * n_patch
    out_dtype = x.dtype

    # Conv3d with stride == kernel silently drops trailing remainders; match that.
    if (D, H, W) != (nd * p, nh * p, nw * p):
        x = x[:, :, : nd * p, : nh * p, : nw * p]

    cdt = x.dtype if compute_dtype is None else compute_dtype

    # --- patchify: (B,C,D,H,W) -> (B*n_patch, K), inner order (C, kd, kh, kw).
    # Cast first so any materialized transpose moves compute-dtype bytes; the
    # allow_input_fusion hint below lets XLA fold this layout change into the
    # kernel's input DMA so it does not cost an extra HBM round trip.
    xp = x.astype(cdt).reshape(B, C, nd, p, nh, p, nw, p)
    xp = xp.transpose(0, 2, 4, 6, 1, 3, 5, 7).reshape(M, K)

    # --- weight stays (E, K): K on the lane axis => dense DMA + dense VMEM tile.
    # (In a real model, do this reshape/pad once at parameter init, not per call.)
    E_pad = max(_round_up(E, 128), 128)
    w = weight.reshape(E, K).astype(cdt)
    b = bias.astype(jnp.float32)
    if E_pad != E:
        w = jnp.pad(w, ((0, E_pad - E), (0, 0)))
        b = jnp.pad(b, (0, E_pad - E))
    b = b.reshape(1, E_pad)

    tm, tk = _choose_tiles(M, K, E_pad, jnp.dtype(cdt).itemsize, vmem_budget_bytes)
    nm, nk = pl.cdiv(M, tm), pl.cdiv(K, tk)

    if nk == 1:
        # Fast path: 1-D grid over M; weight/bias constant over the grid (resident),
        # result written directly to the output block (no scratch, no branches).
        grid_spec = pltpu.PrefetchScalarGridSpec(
            num_scalar_prefetch=0,
            grid=(nm,),
            in_specs=[
                pl.BlockSpec((tm, K), lambda i: (i, 0)),        # activations
                pl.BlockSpec((E_pad, K), lambda i: (0, 0)),     # weight (resident)
                pl.BlockSpec((1, E_pad), lambda i: (0, 0)),     # bias (resident)
            ],
            out_specs=pl.BlockSpec((tm, E_pad), lambda i: (i, 0)),
        )
        kernel = _patch_embed_kernel_single
        dim_sem = ("parallel",)
    else:
        grid_spec = pltpu.PrefetchScalarGridSpec(
            num_scalar_prefetch=0,
            grid=(nm, nk),  # reduction (K) axis last
            in_specs=[
                pl.BlockSpec((tm, tk), lambda i, k: (i, k)),      # activations
                pl.BlockSpec((E_pad, tk), lambda i, k: (0, k)),   # weight
                pl.BlockSpec((1, E_pad), lambda i, k: (0, 0)),    # bias
            ],
            out_specs=pl.BlockSpec((tm, E_pad), lambda i, k: (i, 0)),
            scratch_shapes=[pltpu.VMEM((tm, E_pad), jnp.float32)],
        )
        kernel = _patch_embed_kernel_splitk
        dim_sem = ("parallel", "arbitrary")

    out = pl.pallas_call(
        kernel,
        out_shape=jax.ShapeDtypeStruct((M, E_pad), out_dtype),
        grid_spec=grid_spec,
        compiler_params=pltpu.CompilerParams(
            # M tiles are independent -> shardable across v7x's two TensorCores;
            # K (when split) is the accumulated reduction.
            dimension_semantics=dim_sem,
            vmem_limit_bytes=48 * 1024 * 1024,
            # Allow XLA to fuse the patchify reshape/transpose into the x input DMA.
            allow_input_fusion=[True, False, False],
        ),
    )(xp, w, b)

    return out[:, :E].reshape(B, n_patch, E)


if __name__ == "__main__":
    # Small shapes consistent with the module: Conv3d -> 5-D input (B, C, D, H, W)
    B, C = 2, 4
    D = H = W = 16
    patch_size = 8
    emb_size = 32

    key = jax.random.PRNGKey(0)
    kx, kw, kb = jax.random.split(key, 3)

    x = jax.random.normal(kx, (B, C, D, H, W), dtype=jnp.float32)
    fan_in = C * patch_size ** 3
    bound = 1.0 / (fan_in ** 0.5)
    weight = jax.random.uniform(
        kw, (emb_size, C, patch_size, patch_size, patch_size),
        minval=-bound, maxval=bound, dtype=jnp.float32)
    bias = jax.random.uniform(kb, (emb_size,), minval=-bound, maxval=bound,
                              dtype=jnp.float32)

    # Reference: plain XLA conv with identical semantics.
    ref = jax.lax.conv_general_dilated(
        x, weight,
        window_strides=(patch_size,) * 3,
        padding="VALID",
        dimension_numbers=("NCDHW", "OIDHW", "NCDHW"),
    ) + bias.reshape(1, emb_size, 1, 1, 1)
    ref = ref.reshape(B, emb_size, -1).transpose(0, 2, 1)
    n_patch = (D // patch_size) * (H // patch_size) * (W // patch_size)

    # 1) Default full-K fast path.
    out = patch_embedding_forward(x, weight, bias, patch_size=patch_size)
    out = jax.block_until_ready(out)
    assert out.shape == (B, n_patch, emb_size)
    assert jnp.allclose(out, ref, atol=1e-3, rtol=1e-3)

    # 2) Split-K accumulator path (forced with an artificially tiny VMEM budget).
    out_splitk = patch_embedding_forward(
        x, weight, bias, patch_size=patch_size,
        vmem_budget_bytes=1536 * 1024)
    out_splitk = jax.block_until_ready(out_splitk)
    assert out_splitk.shape == (B, n_patch, emb_size)
    assert jnp.allclose(out_splitk, ref, atol=1e-3, rtol=1e-3)

    # 3) Optional bf16 compute path (f32 accumulation) -- halves HBM traffic.
    out_bf16 = patch_embedding_forward(x, weight, bias, patch_size=patch_size,
                                       compute_dtype=jnp.bfloat16)
    out_bf16 = jax.block_until_ready(out_bf16)
    assert out_bf16.shape == (B, n_patch, emb_size)
    assert jnp.allclose(out_bf16, ref, atol=7e-2, rtol=7e-2)

    print("KERNEL_OK")
</pallas_src>

<mosaic_0001>
module attributes {stable_mosaic.version = 11 : i64} {
  func.func @_patch_embed_kernel_single(%arg0: i32, %arg1: memref<16x2048xf32, #tpu.memory_space<vmem>>, %arg2: memref<128x2048xf32, #tpu.memory_space<vmem>>, %arg3: memref<1x128xf32, #tpu.memory_space<vmem>>, %arg4: memref<16x128xf32, #tpu.memory_space<vmem>>) attributes {dimension_semantics = [#tpu.dimension_semantics<parallel>], iteration_bounds = array<i64: 1>, scalar_prefetch = 0 : i64, scratch_operands = 0 : i64, tpu.core_type = #tpu.core_type<tc>, window_params = [{transform_indices = @transform_0, window_bounds = array<i64: 16, 2048>}, {pipeline_mode = #tpu.pipeline_mode<synchronous>, transform_indices = @transform_1, window_bounds = array<i64: 128, 2048>}, {pipeline_mode = #tpu.pipeline_mode<synchronous>, transform_indices = @transform_2, window_bounds = array<i64: 1, 128>}, {transform_indices = @transform_3, window_bounds = array<i64: 16, 128>}]} {
    %c0 = arith.constant 0 : index
    %c0_0 = arith.constant 0 : index
    %0 = vector.load %arg1[%c0, %c0_0] : memref<16x2048xf32, #tpu.memory_space<vmem>>, vector<16x2048xf32>
    %c0_1 = arith.constant 0 : index
    %c0_2 = arith.constant 0 : index
    %1 = vector.load %arg2[%c0_1, %c0_2] : memref<128x2048xf32, #tpu.memory_space<vmem>>, vector<128x2048xf32>
    %cst = arith.constant dense<0.000000e+00> : vector<16x128xf32>
    %2 = tpu.matmul %0, %1, %cst {dimension_numbers = #tpu.dot_dimension_numbers<[1], [1], [0], [0], [0, 0, 1, 0], [], []>} : vector<16x2048xf32>, vector<128x2048xf32>, vector<16x128xf32> -> vector<16x128xf32>
    %c0_3 = arith.constant 0 : index
    %c0_4 = arith.constant 0 : index
    %3 = vector.load %arg3[%c0_3, %c0_4] : memref<1x128xf32, #tpu.memory_space<vmem>>, vector<1x128xf32>
    %4 = vector.broadcast %3 : vector<1x128xf32> to vector<16x128xf32>
    %5 = arith.addf %2, %4 : vector<16x128xf32>
    %c0_5 = arith.constant 0 : index
    %c0_6 = arith.constant 0 : index
    %6 = vector.load %arg4[%c0_5, %c0_6] : memref<16x128xf32, #tpu.memory_space<vmem>>, vector<16x128xf32>
    tpu.vector_store %arg4[%c0_5, %c0_6], %5 {strides = array<i32>} : memref<16x128xf32, #tpu.memory_space<vmem>>, vector<16x128xf32>,
    return
  }
  func.func @transform_0(%arg0: i32) -> (i32, i32) {
    %c0_i32 = arith.constant 0 : i32
    %c0_i32_0 = arith.constant 0 : i32
    return %arg0, %c0_i32 : i32, i32
  }
  func.func @transform_1(%arg0: i32) -> (i32, i32) {
    %c0_i32 = arith.constant 0 : i32
    %c0_i32_0 = arith.constant 0 : i32
    %c0_i32_1 = arith.constant 0 : i32
    return %c0_i32, %c0_i32_0 : i32, i32
  }
  func.func @transform_2(%arg0: i32) -> (i32, i32) {
    %c0_i32 = arith.constant 0 : i32
    %c0_i32_0 = arith.constant 0 : i32
    %c0_i32_1 = arith.constant 0 : i32
    return %c0_i32, %c0_i32_0 : i32, i32
  }
  func.func @transform_3(%arg0: i32) -> (i32, i32) {
    %c0_i32 = arith.constant 0 : i32
    %c0_i32_0 = arith.constant 0 : i32
    return %arg0, %c0_i32 : i32, i32
  }
}

</mosaic_0001>

<llo_original>
// kernel: patch_embedding_forward.1
$region0: #{patch_embedding_forward.1}
  #allocation0 [shape = 'u32[]', space=smem, size = 0x4, offset = 0x4, fixed_abs, tag = 'smem constant byte address 0x4 - core index']
  #allocation1 [shape = 'u32[144,128]{1,0:T(1,128)}', space=vmem, size = 0x12000, scoped, tag = 'internal scratch']
  %s0 = inlined_call_operand.vmem [shape: f32[16,2048], index: 0, kind: input, shape index: {}]
  %s1 = inlined_call_operand.vmem [shape: f32[128,2048], index: 1, kind: input, shape index: {}]
  %s2 = inlined_call_operand.vmem [shape: f32[1,128], index: 2, kind: input, shape index: {}]
  %s3 = inlined_call_operand.vmem [shape: f32[16,128], index: 3, kind: output, shape index: {}]
  %s4 = sld [smem:[#allocation0]]
  $region22: #{patch_embedding_forward.1} parent=0
    _
  %s6 = ssub.s32 1, %s4
  %s7 = scalar_select 0, %s6, %s4
  // Predicated region
  $region2: #{patch_embedding_forward.1} parent=0 // pred_check
    _
  $region3: #{patch_embedding_forward.1} parent=0 // pred_check_branch
    %9 = sbr.rel (0) target = $region5
  $region4: #{patch_embedding_forward.1} parent=0 // pred_region
    _
  $region5: #{patch_embedding_forward.1} parent=0 // pred_fallthru
    _
  // Predicated region
  $region6: #{patch_embedding_forward.1} parent=0 // pred_check
    _
  $region7: #{patch_embedding_forward.1} parent=0 // pred_check_branch
    %11 = sbr.rel (0) target = $region9
  $region8: #{patch_embedding_forward.1} parent=0 // pred_region
    _
  $region9: #{patch_embedding_forward.1} parent=0 // pred_fallthru
    _
  // Predicated region
  $region10: #{patch_embedding_forward.1} parent=0 // pred_check
    _
  $region11: #{patch_embedding_forward.1} parent=0 // pred_check_branch
    %13 = sbr.rel (0) target = $region13
  $region12: #{patch_embedding_forward.1} parent=0 // pred_region
    _
  $region13: #{patch_embedding_forward.1} parent=0 // pred_fallthru
    _
  %v14 = vld [vmem:[%s0] sm:$0xff]
  %v15 = vld [vmem:[%s0 + $0x8] sm:$0xff]
  %v16 = vld [vmem:[%s0 + $0x10] sm:$0xff]
  %v17 = vld [vmem:[%s0 + $0x18] sm:$0xff]
  %v18 = vld [vmem:[%s0 + $0x20] sm:$0xff]
  %v19 = vld [vmem:[%s0 + $0x28] sm:$0xff]
  %v20 = vld [vmem:[%s0 + $0x30] sm:$0xff]
  %v21 = vld [vmem:[%s0 + $0x38] sm:$0xff]
  %v22 = vld [vmem:[%s0 + $0x40] sm:$0xff]
  %v23 = vld [vmem:[%s0 + $0x48] sm:$0xff]
  %v24 = vld [vmem:[%s0 + $0x50] sm:$0xff]
  %v25 = vld [vmem:[%s0 + $0x58] sm:$0xff]
  %v26 = vld [vmem:[%s0 + $0x60] sm:$0xff]
  %v27 = vld [vmem:[%s0 + $0x68] sm:$0xff]
  %v28 = vld [vmem:[%s0 + $0x70] sm:$0xff]
  %v29 = vld [vmem:[%s0 + $0x78] sm:$0xff]
  %v30 = vld [vmem:[%s0 + $0x80] sm:$0xff]
  %v31 = vld [vmem:[%s0 + $0x88] sm:$0xff]
  %v32 = vld [vmem:[%s0 + $0x90] sm:$0xff]
  %v33 = vld [vmem:[%s0 + $0x98] sm:$0xff]
  %v34 = vld [vmem:[%s0 + $0xa0] sm:$0xff]
  %v35 = vld [vmem:[%s0 + $0xa8] sm:$0xff]
  %v36 = vld [vmem:[%s0 + $0xb0] sm:$0xff]
  %v37 = vld [vmem:[%s0 + $0xb8] sm:$0xff]
  %v38 = vld [vmem:[%s0 + $0xc0] sm:$0xff]
  %v39 = vld [vmem:[%s0 + $0xc8] sm:$0xff]
  %v40 = vld [vmem:[%s0 + $0xd0] sm:$0xff]
  %v41 = vld [vmem:[%s0 + $0xd8] sm:$0xff]
  %v42 = vld [vmem:[%s0 + $0xe0] sm:$0xff]
  %v43 = vld [vmem:[%s0 + $0xe8] sm:$0xff]
  %v44 = vld [vmem:[%s0 + $0xf0] sm:$0xff]
  %v45 = vld [vmem:[%s0 + $0xf8] sm:$0xff]
  %v46 = vld [vmem:[%s1] sm:$0xff]
  %v47 = vld [vmem:[%s1 + $0x8] sm:$0xff]
  %v48 = vld [vmem:[%s1 + $0x10] sm:$0xff]
  %v49 = vld [vmem:[%s1 + $0x18] sm:$0xff]
  %v50 = vld [vmem:[%s1 + $0x20] sm:$0xff]
  %v51 = vld [vmem:[%s1 + $0x28] sm:$0xff]
  %v52 = vld [vmem:[%s1 + $0x30] sm:$0xff]
  %v53 = vld [vmem:[%s1 + $0x38] sm:$0xff]
  %v54 = vld [vmem:[%s1 + $0x40] sm:$0xff]
  %v55 = vld [vmem:[%s1 + $0x48] sm:$0xff]
  %v56 = vld [vmem:[%s1 + $0x50] sm:$0xff]
  %v57 = vld [vmem:[%s1 + $0x58] sm:$0xff]
  %v58 = vld [vmem:[%s1 + $0x60] sm:$0xff]
  %v59 = vld [vmem:[%s1 + $0x68] sm:$0xff]
  %v60 = vld [vmem:[%s1 + $0x70] sm:$0xff]
  %v61 = vld [vmem:[%s1 + $0x78] sm:$0xff]
  %v62 = vld [vmem:[%s1 + $0x80] sm:$0xff]
  %v63 = vld [vmem:[%s1 + $0x88] sm:$0xff]
  %v64 = vld [vmem:[%s1 + $0x90] sm:$0xff]
  %v65 = vld [vmem:[%s1 + $0x98] sm:$0xff]
  %v66 = vld [vmem:[%s1 + $0xa0] sm:$0xff]
  %v67 = vld [vmem:[%s1 + $0xa8] sm:$0xff]
  %v68 = vld [vmem:[%s1 + $0xb0] sm:$0xff]
  %v69 = vld [vmem:[%s1 + $0xb8] sm:$0xff]
  %v70 = vld [vmem:[%s1 + $0xc0] sm:$0xff]
  %v71 = vld [vmem:[%s1 + $0xc8] sm:$0xff]
  %v72 = vld [vmem:[%s1 + $0xd0] sm:$0xff]
  %v73 = vld [vmem:[%s1 + $0xd8] sm:$0xff]
  %v74 = vld [vmem:[%s1 + $0xe0] sm:$0xff]
  %v75 = vld [vmem:[%s1 + $0xe8] sm:$0xff]
  %v76 = vld [vmem:[%s1 + $0xf0] sm:$0xff]
  %v77 = vld [vmem:[%s1 + $0xf8] sm:$0xff]
  %v78 = vld [vmem:[%s1 + $0x100] sm:$0xff]
  %v79 = vld [vmem:[%s1 + $0x108] sm:$0xff]
  %v80 = vld [vmem:[%s1 + $0x110] sm:$0xff]
  %v81 = vld [vmem:[%s1 + $0x118] sm:$0xff]
  %v82 = vld [vmem:[%s1 + $0x120] sm:$0xff]
  %v83 = vld [vmem:[%s1 + $0x128] sm:$0xff]
  %v84 = vld [vmem:[%s1 + $0x130] sm:$0xff]
  %v85 = vld [vmem:[%s1 + $0x138] sm:$0xff]
  %v86 = vld [vmem:[%s1 + $0x140] sm:$0xff]
  %v87 = vld [vmem:[%s1 + $0x148] sm:$0xff]
  %v88 = vld [vmem:[%s1 + $0x150] sm:$0xff]
  %v89 = vld [vmem:[%s1 + $0x158] sm:$0xff]
  %v90 = vld [vmem:[%s1 + $0x160] sm:$0xff]
  %v91 = vld [vmem:[%s1 + $0x168] sm:$0xff]
  %v92 = vld [vmem:[%s1 + $0x170] sm:$0xff]
  %v93 = vld [vmem:[%s1 + $0x178] sm:$0xff]
  %v94 = vld [vmem:[%s1 + $0x180] sm:$0xff]
  %v95 = vld [vmem:[%s1 + $0x188] sm:$0xff]
  %v96 = vld [vmem:[%s1 + $0x190] sm:$0xff]
  %v97 = vld [vmem:[%s1 + $0x198] sm:$0xff]
  %v98 = vld [vmem:[%s1 + $0x1a0] sm:$0xff]
  %v99 = vld [vmem:[%s1 + $0x1a8] sm:$0xff]
  %v100 = vld [vmem:[%s1 + $0x1b0] sm:$0xff]
  %v101 = vld [vmem:[%s1 + $0x1b8] sm:$0xff]
  %v102 = vld [vmem:[%s1 + $0x1c0] sm:$0xff]
  %v103 = vld [vmem:[%s1 + $0x1c8] sm:$0xff]
  %v104 = vld [vmem:[%s1 + $0x1d0] sm:$0xff]
  %v105 = vld [vmem:[%s1 + $0x1d8] sm:$0xff]
  %v106 = vld [vmem:[%s1 + $0x1e0] sm:$0xff]
  %v107 = vld [vmem:[%s1 + $0x1e8] sm:$0xff]
  %v108 = vld [vmem:[%s1 + $0x1f0] sm:$0xff]
  %v109 = vld [vmem:[%s1 + $0x1f8] sm:$0xff]
  %v110 = vld [vmem:[%s1 + $0x200] sm:$0xff]
  %v111 = vld [vmem:[%s1 + $0x208] sm:$0xff]
  %v112 = vld [vmem:[%s1 + $0x210] sm:$0xff]
  %v113 = vld [vmem:[%s1 + $0x218] sm:$0xff]
  %v114 = vld [vmem:[%s1 + $0x220] sm:$0xff]
  %v115 = vld [vmem:[%s1 + $0x228] sm:$0xff]
  %v116 = vld [vmem:[%s1 + $0x230] sm:$0xff]
  %v117 = vld [vmem:[%s1 + $0x238] sm:$0xff]
  %v118 = vld [vmem:[%s1 + $0x240] sm:$0xff]
  %v119 = vld [vmem:[%s1 + $0x248] sm:$0xff]
  %v120 = vld [vmem:[%s1 + $0x250] sm:$0xff]
  %v121 = vld [vmem:[%s1 + $0x258] sm:$0xff]
  %v122 = vld [vmem:[%s1 + $0x260] sm:$0xff]
  %v123 = vld [vmem:[%s1 + $0x268] sm:$0xff]
  %v124 = vld [vmem:[%s1 + $0x270] sm:$0xff]
  %v125 = vld [vmem:[%s1 + $0x278] sm:$0xff]
  %v126 = vld [vmem:[%s1 + $0x280] sm:$0xff]
  %v127 = vld [vmem:[%s1 + $0x288] sm:$0xff]
  %v128 = vld [vmem:[%s1 + $0x290] sm:$0xff]
  %v129 = vld [vmem:[%s1 + $0x298] sm:$0xff]
  %v130 = vld [vmem:[%s1 + $0x2a0] sm:$0xff]
  %v131 = vld [vmem:[%s1 + $0x2a8] sm:$0xff]
  %v132 = vld [vmem:[%s1 + $0x2b0] sm:$0xff]
  %v133 = vld [vmem:[%s1 + $0x2b8] sm:$0xff]
  %v134 = vld [vmem:[%s1 + $0x2c0] sm:$0xff]
  %v135 = vld [vmem:[%s1 + $0x2c8] sm:$0xff]
  %v136 = vld [vmem:[%s1 + $0x2d0] sm:$0xff]
  %v137 = vld [vmem:[%s1 + $0x2d8] sm:$0xff]
  %v138 = vld [vmem:[%s1 + $0x2e0] sm:$0xff]
  %v139 = vld [vmem:[%s1 + $0x2e8] sm:$0xff]
  %v140 = vld [vmem:[%s1 + $0x2f0] sm:$0xff]
  %v141 = vld [vmem:[%s1 + $0x2f8] sm:$0xff]
  %v142 = vld [vmem:[%s1 + $0x300] sm:$0xff]
  %v143 = vld [vmem:[%s1 + $0x308] sm:$0xff]
  %v144 = vld [vmem:[%s1 + $0x310] sm:$0xff]
  %v145 = vld [vmem:[%s1 + $0x318] sm:$0xff]
  %v146 = vld [vmem:[%s1 + $0x320] sm:$0xff]
  %v147 = vld [vmem:[%s1 + $0x328] sm:$0xff]
  %v148 = vld [vmem:[%s1 + $0x330] sm:$0xff]
  %v149 = vld [vmem:[%s1 + $0x338] sm:$0xff]
  %v150 = vld [vmem:[%s1 + $0x340] sm:$0xff]
  %v151 = vld [vmem:[%s1 + $0x348] sm:$0xff]
  %v152 = vld [vmem:[%s1 + $0x350] sm:$0xff]
  %v153 = vld [vmem:[%s1 + $0x358] sm:$0xff]
  %v154 = vld [vmem:[%s1 + $0x360] sm:$0xff]
  %v155 = vld [vmem:[%s1 + $0x368] sm:$0xff]
  %v156 = vld [vmem:[%s1 + $0x370] sm:$0xff]
  %v157 = vld [vmem:[%s1 + $0x378] sm:$0xff]
  %v158 = vld [vmem:[%s1 + $0x380] sm:$0xff]
  %v159 = vld [vmem:[%s1 + $0x388] sm:$0xff]
  %v160 = vld [vmem:[%s1 + $0x390] sm:$0xff]
  %v161 = vld [vmem:[%s1 + $0x398] sm:$0xff]
  %v162 = vld [vmem:[%s1 + $0x3a0] sm:$0xff]
  %v163 = vld [vmem:[%s1 + $0x3a8] sm:$0xff]
  %v164 = vld [vmem:[%s1 + $0x3b0] sm:$0xff]
  %v165 = vld [vmem:[%s1 + $0x3b8] sm:$0xff]
  %v166 = vld [vmem:[%s1 + $0x3c0] sm:$0xff]
  %v167 = vld [vmem:[%s1 + $0x3c8] sm:$0xff]
  %v168 = vld [vmem:[%s1 + $0x3d0] sm:$0xff]
  %v169 = vld [vmem:[%s1 + $0x3d8] sm:$0xff]
  %v170 = vld [vmem:[%s1 + $0x3e0] sm:$0xff]
  %v171 = vld [vmem:[%s1 + $0x3e8] sm:$0xff]
  %v172 = vld [vmem:[%s1 + $0x3f0] sm:$0xff]
  %v173 = vld [vmem:[%s1 + $0x3f8] sm:$0xff]
  %v174 = vld [vmem:[%s1 + $0x400] sm:$0xff]
  %v175 = vld [vmem:[%s1 + $0x408] sm:$0xff]
  %v176 = vld [vmem:[%s1 + $0x410] sm:$0xff]
  %v177 = vld [vmem:[%s1 + $0x418] sm:$0xff]
  %v178 = vld [vmem:[%s1 + $0x420] sm:$0xff]
  %v179 = vld [vmem:[%s1 + $0x428] sm:$0xff]
  %v180 = vld [vmem:[%s1 + $0x430] sm:$0xff]
  %v181 = vld [vmem:[%s1 + $0x438] sm:$0xff]
  %v182 = vld [vmem:[%s1 + $0x440] sm:$0xff]
  %v183 = vld [vmem:[%s1 + $0x448] sm:$0xff]
  %v184 = vld [vmem:[%s1 + $0x450] sm:$0xff]
  %v185 = vld [vmem:[%s1 + $0x458] sm:$0xff]
  %v186 = vld [vmem:[%s1 + $0x460] sm:$0xff]
  %v187 = vld [vmem:[%s1 + $0x468] sm:$0xff]
  %v188 = vld [vmem:[%s1 + $0x470] sm:$0xff]
  %v189 = vld [vmem:[%s1 + $0x478] sm:$0xff]
  %v190 = vld [vmem:[%s1 + $0x480] sm:$0xff]
  %v191 = vld [vmem:[%s1 + $0x488] sm:$0xff]
  %v192 = vld [vmem:[%s1 + $0x490] sm:$0xff]
  %v193 = vld [vmem:[%s1 + $0x498] sm:$0xff]
  %v194 = vld [vmem:[%s1 + $0x4a0] sm:$0xff]
  %v195 = vld [vmem:[%s1 + $0x4a8] sm:$0xff]
  %v196 = vld [vmem:[%s1 + $0x4b0] sm:$0xff]
  %v197 = vld [vmem:[%s1 + $0x4b8] sm:$0xff]
  %v198 = vld [vmem:[%s1 + $0x4c0] sm:$0xff]
  %v199 = vld [vmem:[%s1 + $0x4c8] sm:$0xff]
  %v200 = vld [vmem:[%s1 + $0x4d0] sm:$0xff]
  %v201 = vld [vmem:[%s1 + $0x4d8] sm:$0xff]
  %v202 = vld [vmem:[%s1 + $0x4e0] sm:$0xff]
  %v203 = vld [vmem:[%s1 + $0x4e8] sm:$0xff]
  %v204 = vld [vmem:[%s1 + $0x4f0] sm:$0xff]
  %v205 = vld [vmem:[%s1 + $0x4f8] sm:$0xff]
  %v206 = vld [vmem:[%s1 + $0x500] sm:$0xff]
  %v207 = vld [vmem:[%s1 + $0x508] sm:$0xff]
  %v208 = vld [vmem:[%s1 + $0x510] sm:$0xff]
  %v209 = vld [vmem:[%s1 + $0x518] sm:$0xff]
  %v210 = vld [vmem:[%s1 + $0x520] sm:$0xff]
  %v211 = vld [vmem:[%s1 + $0x528] sm:$0xff]
  %v212 = vld [vmem:[%s1 + $0x530] sm:$0xff]
  %v213 = vld [vmem:[%s1 + $0x538] sm:$0xff]
  %v214 = vld [vmem:[%s1 + $0x540] sm:$0xff]
  %v215 = vld [vmem:[%s1 + $0x548] sm:$0xff]
  %v216 = vld [vmem:[%s1 + $0x550] sm:$0xff]
  %v217 = vld [vmem:[%s1 + $0x558] sm:$0xff]
  %v218 = vld [vmem:[%s1 + $0x560] sm:$0xff]
  %v219 = vld [vmem:[%s1 + $0x568] sm:$0xff]
  %v220 = vld [vmem:[%s1 + $0x570] sm:$0xff]
  %v221 = vld [vmem:[%s1 + $0x578] sm:$0xff]
  %v222 = vld [vmem:[%s1 + $0x580] sm:$0xff]
  %v223 = vld [vmem:[%s1 + $0x588] sm:$0xff]
  %v224 = vld [vmem:[%s1 + $0x590] sm:$0xff]
  %v225 = vld [vmem:[%s1 + $0x598] sm:$0xff]
  %v226 = vld [vmem:[%s1 + $0x5a0] sm:$0xff]
  %v227 = vld [vmem:[%s1 + $0x5a8] sm:$0xff]
  %v228 = vld [vmem:[%s1 + $0x5b0] sm:$0xff]
  %v229 = vld [vmem:[%s1 + $0x5b8] sm:$0xff]
  %v230 = vld [vmem:[%s1 + $0x5c0] sm:$0xff]
  %v231 = vld [vmem:[%s1 + $0x5c8] sm:$0xff]
  %v232 = vld [vmem:[%s1 + $0x5d0] sm:$0xff]
  %v233 = vld [vmem:[%s1 + $0x5d8] sm:$0xff]
  %v234 = vld [vmem:[%s1 + $0x5e0] sm:$0xff]
  %v235 = vld [vmem:[%s1 + $0x5e8] sm:$0xff]
  %v236 = vld [vmem:[%s1 + $0x5f0] sm:$0xff]
  %v237 = vld [vmem:[%s1 + $0x5f8] sm:$0xff]
  %v238 = vld [vmem:[%s1 + $0x600] sm:$0xff]
  %v239 = vld [vmem:[%s1 + $0x608] sm:$0xff]
  %v240 = vld [vmem:[%s1 + $0x610] sm:$0xff]
  %v241 = vld [vmem:[%s1 + $0x618] sm:$0xff]
  %v242 = vld [vmem:[%s1 + $0x620] sm:$0xff]
  %v243 = vld [vmem:[%s1 + $0x628] sm:$0xff]
  %v244 = vld [vmem:[%s1 + $0x630] sm:$0xff]
  %v245 = vld [vmem:[%s1 + $0x638] sm:$0xff]
  %v246 = vld [vmem:[%s1 + $0x640] sm:$0xff]
  %v247 = vld [vmem:[%s1 + $0x648] sm:$0xff]
  %v248 = vld [vmem:[%s1 + $0x650] sm:$0xff]
  %v249 = vld [vmem:[%s1 + $0x658] sm:$0xff]
  %v250 = vld [vmem:[%s1 + $0x660] sm:$0xff]
  %v251 = vld [vmem:[%s1 + $0x668] sm:$0xff]
  %v252 = vld [vmem:[%s1 + $0x670] sm:$0xff]
  %v253 = vld [vmem:[%s1 + $0x678] sm:$0xff]
  %v254 = vld [vmem:[%s1 + $0x680] sm:$0xff]
  %v255 = vld [vmem:[%s1 + $0x688] sm:$0xff]
  %v256 = vld [vmem:[%s1 + $0x690] sm:$0xff]
  %v257 = vld [vmem:[%s1 + $0x698] sm:$0xff]
  %v258 = vld [vmem:[%s1 + $0x6a0] sm:$0xff]
  %v259 = vld [vmem:[%s1 + $0x6a8] sm:$0xff]
  %v260 = vld [vmem:[%s1 + $0x6b0] sm:$0xff]
  %v261 = vld [vmem:[%s1 + $0x6b8] sm:$0xff]
  %v262 = vld [vmem:[%s1 + $0x6c0] sm:$0xff]
  %v263 = vld [vmem:[%s1 + $0x6c8] sm:$0xff]
  %v264 = vld [vmem:[%s1 + $0x6d0] sm:$0xff]
  %v265 = vld [vmem:[%s1 + $0x6d8] sm:$0xff]
  %v266 = vld [vmem:[%s1 + $0x6e0] sm:$0xff]
  %v267 = vld [vmem:[%s1 + $0x6e8] sm:$0xff]
  %v268 = vld [vmem:[%s1 + $0x6f0] sm:$0xff]
  %v269 = vld [vmem:[%s1 + $0x6f8] sm:$0xff]
  %v270 = vld [vmem:[%s1 + $0x700] sm:$0xff]
  %v271 = vld [vmem:[%s1 + $0x708] sm:$0xff]
  %v272 = vld [vmem:[%s1 + $0x710] sm:$0xff]
  %v273 = vld [vmem:[%s1 + $0x718] sm:$0xff]
  %v274 = vld [vmem:[%s1 + $0x720] sm:$0xff]
  %v275 = vld [vmem:[%s1 + $0x728] sm:$0xff]
  %v276 = vld [vmem:[%s1 + $0x730] sm:$0xff]
  %v277 = vld [vmem:[%s1 + $0x738] sm:$0xff]
  %v278 = vld [vmem:[%s1 + $0x740] sm:$0xff]
  %v279 = vld [vmem:[%s1 + $0x748] sm:$0xff]
  %v280 = vld [vmem:[%s1 + $0x750] sm:$0xff]
  %v281 = vld [vmem:[%s1 + $0x758] sm:$0xff]
  %v282 = vld [vmem:[%s1 + $0x760] sm:$0xff]
  %v283 = vld [vmem:[%s1 + $0x768] sm:$0xff]
  %v284 = vld [vmem:[%s1 + $0x770] sm:$0xff]
  %v285 = vld [vmem:[%s1 + $0x778] sm:$0xff]
  %v286 = vld [vmem:[%s1 + $0x780] sm:$0xff]
  %v287 = vld [vmem:[%s1 + $0x788] sm:$0xff]
  %v288 = vld [vmem:[%s1 + $0x790] sm:$0xff]
  %v289 = vld [vmem:[%s1 + $0x798] sm:$0xff]
  %v290 = vld [vmem:[%s1 + $0x7a0] sm:$0xff]
  %v291 = vld [vmem:[%s1 + $0x7a8] sm:$0xff]
  %v292 = vld [vmem:[%s1 + $0x7b0] sm:$0xff]
  %v293 = vld [vmem:[%s1 + $0x7b8] sm:$0xff]
  %v294 = vld [vmem:[%s1 + $0x7c0] sm:$0xff]
  %v295 = vld [vmem:[%s1 + $0x7c8] sm:$0xff]
  %v296 = vld [vmem:[%s1 + $0x7d0] sm:$0xff]
  %v297 = vld [vmem:[%s1 + $0x7d8] sm:$0xff]
  %v298 = vld [vmem:[%s1 + $0x7e0] sm:$0xff]
  %v299 = vld [vmem:[%s1 + $0x7e8] sm:$0xff]
  %v300 = vld [vmem:[%s1 + $0x7f0] sm:$0xff]
  %v301 = vld [vmem:[%s1 + $0x7f8] sm:$0xff]
  %v302 = vld [vmem:[%s2] sm:$0x1]
  %v304 = vlaneseq
  %v305 = vshrl.u32 %v304, 7
  %v306 = vsub.s32 0, %v305
  %v307 = vrot.slane %v302, %v306
  %309 = vmatprep.subr.mxu0 %v287
  %310 = vmatpush1.xpose.msra.mxu0 %v286
  %311 = vmatprep.subr.mxu0 %v271
  %312 = vmatpush1.xpose.msra.mxu0 %v270
  %313 = vmatprep.subr.mxu0 %v255
  %314 = vmatpush1.xpose.msra.mxu0 %v254
  %315 = vmatprep.subr.mxu0 %v239
  %316 = vmatpush1.xpose.msra.mxu0 %v238
  %317 = vmatprep.subr.mxu0 %v223
  %318 = vmatpush1.xpose.msra.mxu0 %v222
  %319 = vmatprep.subr.mxu0 %v207
  %320 = vmatpush1.xpose.msra.mxu0 %v206
  %321 = vmatprep.subr.mxu0 %v191
  %322 = vmatpush1.xpose.msra.mxu0 %v190
  %323 = vmatprep.subr.mxu0 %v175
  %324 = vmatpush1.xpose.msra.mxu0 %v174
  %325 = vmatprep.subr.mxu0 %v159
  %326 = vmatpush1.xpose.msra.mxu0 %v158
  %327 = vmatprep.subr.mxu0 %v143
  %328 = vmatpush1.xpose.msra.mxu0 %v142
  %329 = vmatprep.subr.mxu0 %v127
  %330 = vmatpush1.xpose.msra.mxu0 %v126
  %331 = vmatprep.subr.mxu0 %v111
  %332 = vmatpush1.xpose.msra.mxu0 %v110
  %333 = vmatprep.subr.mxu0 %v95
  %334 = vmatpush1.xpose.msra.mxu0 %v94
  %335 = vmatprep.subr.mxu0 %v79
  %336 = vmatpush1.xpose.msra.mxu0 %v78
  %337 = vmatprep.subr.mxu0 %v63
  %338 = vmatpush1.xpose.msra.mxu0 %v62
  %339 = vmatprep.subr.mxu0 %v47
  %340 = vmatpush1.xpose.msra.mxu0 %v46
  %341 = vmatprep.subr.mxu0 0.0
  %342 = vmatpush2.xpose.msra.mxu0 0.0
  %343 = vmatprep.subr.mxu0 0.0
  %344 = vmatpush2.xpose.msra.mxu0 0.0
  %345 = vmatprep.subr.mxu0 0.0
  %346 = vmatpush2.xpose.msra.mxu0 0.0
  %347 = vmatprep.subr.mxu0 0.0
  %348 = vmatpush2.xpose.msra.mxu0 0.0
  %349 = vmatprep.subr.mxu0 0.0
  %350 = vmatpush2.xpose.msra.mxu0 0.0
  %351 = vmatprep.subr.mxu0 0.0
  %352 = vmatpush2.xpose.msra.mxu0 0.0
  %353 = vmatprep.subr.mxu0 0.0
  %354 = vmatpush2.xpose.msra.mxu0 0.0
  %355 = vmatprep.subr.mxu0 0.0
  %356 = vmatpush2.xpose.msra.mxu0 0.0
  %357 = vmatprep.subr.mxu0 0.0
  %358 = vmatpush2.xpose.msra.mxu0 0.0
  %359 = vmatprep.subr.mxu0 0.0
  %360 = vmatpush2.xpose.msra.mxu0 0.0
  %361 = vmatprep.subr.mxu0 0.0
  %362 = vmatpush2.xpose.msra.mxu0 0.0
  %363 = vmatprep.subr.mxu0 0.0
  %364 = vmatpush2.xpose.msra.mxu0 0.0
  %365 = vmatprep.subr.mxu0 0.0
  %366 = vmatpush2.xpose.msra.mxu0 0.0
  %367 = vmatprep.subr.mxu0 0.0
  %368 = vmatpush2.xpose.msra.mxu0 0.0
  %369 = vmatprep.subr.mxu0 0.0
  %370 = vmatpush2.xpose.msra.mxu0 0.0
  %371 = vmatprep.subr.mxu0 0.0
  %372 = vmatpush2.xpose.msra.mxu0 0.0
  %373 = vmatprep.mubr.f32.mxu0 %v15
  %374 = vmatmul.mubr.f32.gmra.mxu0 %v14
  %v375 = vpop.f32.mrf.mxu0
  %v376 = vadd.f32 %v307, %v375
  %v377 = vpop.f32.mrf.mxu0
  %378 = vmatprep.mubr.f32.mxu0 %v31
  %379 = vmatmul.mubr.f32.gmra.mxu0 %v30
  %v380 = vpop.f32.mrf.mxu0
  %v381 = vadd.f32 %v307, %v380
  %v382 = vpop.f32.mrf.mxu0
  %383 = vdwg.mxu0
  %384 = vmatprep.subr.mxu0 %v289
  %385 = vmatpush1.xpose.msra.mxu0 %v288
  %386 = vmatprep.subr.mxu0 %v273
  %387 = vmatpush1.xpose.msra.mxu0 %v272
  %388 = vmatprep.subr.mxu0 %v257
  %389 = vmatpush1.xpose.msra.mxu0 %v256
  %390 = vmatprep.subr.mxu0 %v241
  %391 = vmatpush1.xpose.msra.mxu0 %v240
  %392 = vmatprep.subr.mxu0 %v225
  %393 = vmatpush1.xpose.msra.mxu0 %v224
  %394 = vmatprep.subr.mxu0 %v209
  %395 = vmatpush1.xpose.msra.mxu0 %v208
  %396 = vmatprep.subr.mxu0 %v193
  %397 = vmatpush1.xpose.msra.mxu0 %v192
  %398 = vmatprep.subr.mxu0 %v177
  %399 = vmatpush1.xpose.msra.mxu0 %v176
  %400 = vmatprep.subr.mxu0 %v161
  %401 = vmatpush1.xpose.msra.mxu0 %v160
  %402 = vmatprep.subr.mxu0 %v145
  %403 = vmatpush1.xpose.msra.mxu0 %v144
  %404 = vmatprep.subr.mxu0 %v129
  %405 = vmatpush1.xpose.msra.mxu0 %v128
  %406 = vmatprep.subr.mxu0 %v113
  %407 = vmatpush1.xpose.msra.mxu0 %v112
  %408 = vmatprep.subr.mxu0 %v97
  %409 = vmatpush1.xpose.msra.mxu0 %v96
  %410 = vmatprep.subr.mxu0 %v81
  %411 = vmatpush1.xpose.msra.mxu0 %v80
  %412 = vmatprep.subr.mxu0 %v65
  %413 = vmatpush1.xpose.msra.mxu0 %v64
  %414 = vmatprep.subr.mxu0 %v49
  %415 = vmatpush1.xpose.msra.mxu0 %v48
  %416 = vmatprep.subr.mxu0 0.0
  %417 = vmatpush2.xpose.msra.mxu0 0.0
  %418 = vmatprep.subr.mxu0 0.0
  %419 = vmatpush2.xpose.msra.mxu0 0.0
  %420 = vmatprep.subr.mxu0 0.0
  %421 = vmatpush2.xpose.msra.mxu0 0.0
  %422 = vmatprep.subr.mxu0 0.0
  %423 = vmatpush2.xpose.msra.mxu0 0.0
  %424 = vmatprep.subr.mxu0 0.0
  %425 = vmatpush2.xpose.msra.mxu0 0.0
  %426 = vmatprep.subr.mxu0 0.0
  %427 = vmatpush2.xpose.msra.mxu0 0.0
  %428 = vmatprep.subr.mxu0 0.0
  %429 = vmatpush2.xpose.msra.mxu0 0.0
  %430 = vmatprep.subr.mxu0 0.0
  %431 = vmatpush2.xpose.msra.mxu0 0.0
  %432 = vmatprep.subr.mxu0 0.0
  %433 = vmatpush2.xpose.msra.mxu0 0.0
  %434 = vmatprep.subr.mxu0 0.0
  %435 = vmatpush2.xpose.msra.mxu0 0.0
  %436 = vmatprep.subr.mxu0 0.0
  %437 = vmatpush2.xpose.msra.mxu0 0.0
  %438 = vmatprep.subr.mxu0 0.0
  %439 = vmatpush2.xpose.msra.mxu0 0.0
  %440 = vmatprep.subr.mxu0 0.0
  %441 = vmatpush2.xpose.msra.mxu0 0.0
  %442 = vmatprep.subr.mxu0 0.0
  %443 = vmatpush2.xpose.msra.mxu0 0.0
  %444 = vmatprep.subr.mxu0 0.0
  %445 = vmatpush2.xpose.msra.mxu0 0.0
  %446 = vmatprep.subr.mxu0 0.0
  %447 = vmatpush2.xpose.msra.mxu0 0.0
  %448 = vmatprep.mubr.f32.mxu0 %v17
  %449 = vmatmul.mubr.f32.gmra.mxu0 %v16
  %v450 = vpop.f32.mrf.mxu0
  %v451 = vadd.f32 %v376, %v450
  %v452 = vpop.f32.mrf.mxu0
  %453 = vmatprep.mubr.f32.mxu0 %v33
  %454 = vmatmul.mubr.f32.gmra.mxu0 %v32
  %v455 = vpop.f32.mrf.mxu0
  %v456 = vadd.f32 %v381, %v455
  %v457 = vpop.f32.mrf.mxu0
  %458 = vdwg.mxu0
  %459 = vmatprep.subr.mxu0 %v291
  %460 = vmatpush1.xpose.msra.mxu0 %v290
  %461 = vmatprep.subr.mxu0 %v275
  %462 = vmatpush1.xpose.msra.mxu0 %v274
  %463 = vmatprep.subr.mxu0 %v259
  %464 = vmatpush1.xpose.msra.mxu0 %v258
  %465 = vmatprep.subr.mxu0 %v243
  %466 = vmatpush1.xpose.msra.mxu0 %v242
  %467 = vmatprep.subr.mxu0 %v227
  %468 = vmatpush1.xpose.msra.mxu0 %v226
  %469 = vmatprep.subr.mxu0 %v211
  %470 = vmatpush1.xpose.msra.mxu0 %v210
  %471 = vmatprep.subr.mxu0 %v195
  %472 = vmatpush1.xpose.msra.mxu0 %v194
  %473 = vmatprep.subr.mxu0 %v179
  %474 = vmatpush1.xpose.msra.mxu0 %v178
  %475 = vmatprep.subr.mxu0 %v163
  %476 = vmatpush1.xpose.msra.mxu0 %v162
  %477 = vmatprep.subr.mxu0 %v147
  %478 = vmatpush1.xpose.msra.mxu0 %v146
  %479 = vmatprep.subr.mxu0 %v131
  %480 = vmatpush1.xpose.msra.mxu0 %v130
  %481 = vmatprep.subr.mxu0 %v115
  %482 = vmatpush1.xpose.msra.mxu0 %v114
  %483 = vmatprep.subr.mxu0 %v99
  %484 = vmatpush1.xpose.msra.mxu0 %v98
  %485 = vmatprep.subr.mxu0 %v83
  %486 = vmatpush1.xpose.msra.mxu0 %v82
  %487 = vmatprep.subr.mxu0 %v67
  %488 = vmatpush1.xpose.msra.mxu0 %v66
  %489 = vmatprep.subr.mxu0 %v51
  %490 = vmatpush1.xpose.msra.mxu0 %v50
  %491 = vmatprep.subr.mxu0 0.0
  %492 = vmatpush2.xpose.msra.mxu0 0.0
  %493 = vmatprep.subr.mxu0 0.0
  %494 = vmatpush2.xpose.msra.mxu0 0.0
  %495 = vmatprep.subr.mxu0 0.0
  %496 = vmatpush2.xpose.msra.mxu0 0.0
  %497 = vmatprep.subr.mxu0 0.0
  %498 = vmatpush2.xpose.msra.mxu0 0.0
  %499 = vmatprep.subr.mxu0 0.0
  %500 = vmatpush2.xpose.msra.mxu0 0.0
  %501 = vmatprep.subr.mxu0 0.0
  %502 = vmatpush2.xpose.msra.mxu0 0.0
  %503 = vmatprep.subr.mxu0 0.0
  %504 = vmatpush2.xpose.msra.mxu0 0.0
  %505 = vmatprep.subr.mxu0 0.0
  %506 = vmatpush2.xpose.msra.mxu0 0.0
  %507 = vmatprep.subr.mxu0 0.0
  %508 = vmatpush2.xpose.msra.mxu0 0.0
  %509 = vmatprep.subr.mxu0 0.0
  %510 = vmatpush2.xpose.msra.mxu0 0.0
  %511 = vmatprep.subr.mxu0 0.0
  %512 = vmatpush2.xpose.msra.mxu0 0.0
  %513 = vmatprep.subr.mxu0 0.0
  %514 = vmatpush2.xpose.msra.mxu0 0.0
  %515 = vmatprep.subr.mxu0 0.0
  %516 = vmatpush2.xpose.msra.mxu0 0.0
  %517 = vmatprep.subr.mxu0 0.0
  %518 = vmatpush2.xpose.msra.mxu0 0.0
  %519 = vmatprep.subr.mxu0 0.0
  %520 = vmatpush2.xpose.msra.mxu0 0.0
  %521 = vmatprep.subr.mxu0 0.0
  %522 = vmatpush2.xpose.msra.mxu0 0.0
  %523 = vmatprep.mubr.f32.mxu0 %v19
  %524 = vmatmul.mubr.f32.gmra.mxu0 %v18
  %v525 = vpop.f32.mrf.mxu0
  %v526 = vadd.f32 %v451, %v525
  %v527 = vpop.f32.mrf.mxu0
  %528 = vmatprep.mubr.f32.mxu0 %v35
  %529 = vmatmul.mubr.f32.gmra.mxu0 %v34
  %v530 = vpop.f32.mrf.mxu0
  %v531 = vadd.f32 %v456, %v530
  %v532 = vpop.f32.mrf.mxu0
  %533 = vdwg.mxu0
  %534 = vmatprep.subr.mxu0 %v293
  %535 = vmatpush1.xpose.msra.mxu0 %v292
  %536 = vmatprep.subr.mxu0 %v277
  %537 = vmatpush1.xpose.msra.mxu0 %v276
  %538 = vmatprep.subr.mxu0 %v261
  %539 = vmatpush1.xpose.msra.mxu0 %v260
  %540 = vmatprep.subr.mxu0 %v245
  %541 = vmatpush1.xpose.msra.mxu0 %v244
  %542 = vmatprep.subr.mxu0 %v229
  %543 = vmatpush1.xpose.msra.mxu0 %v228
  %544 = vmatprep.subr.mxu0 %v213
  %545 = vmatpush1.xpose.msra.mxu0 %v212
  %546 = vmatprep.subr.mxu0 %v197
  %547 = vmatpush1.xpose.msra.mxu0 %v196
  %548 = vmatprep.subr.mxu0 %v181
  %549 = vmatpush1.xpose.msra.mxu0 %v180
  %550 = vmatprep.subr.mxu0 %v165
  %551 = vmatpush1.xpose.msra.mxu0 %v164
  %552 = vmatprep.subr.mxu0 %v149
  %553 = vmatpush1.xpose.msra.mxu0 %v148
  %554 = vmatprep.subr.mxu0 %v133
  %555 = vmatpush1.xpose.msra.mxu0 %v132
  %556 = vmatprep.subr.mxu0 %v117
  %557 = vmatpush1.xpose.msra.mxu0 %v116
  %558 = vmatprep.subr.mxu0 %v101
  %559 = vmatpush1.xpose.msra.mxu0 %v100
  %560 = vmatprep.subr.mxu0 %v85
  %561 = vmatpush1.xpose.msra.mxu0 %v84
  %562 = vmatprep.subr.mxu0 %v69
  %563 = vmatpush1.xpose.msra.mxu0 %v68
  %564 = vmatprep.subr.mxu0 %v53
  %565 = vmatpush1.xpose.msra.mxu0 %v52
  %566 = vmatprep.subr.mxu0 0.0
  %567 = vmatpush2.xpose.msra.mxu0 0.0
  %568 = vmatprep.subr.mxu0 0.0
  %569 = vmatpush2.xpose.msra.mxu0 0.0
  %570 = vmatprep.subr.mxu0 0.0
  %571 = vmatpush2.xpose.msra.mxu0 0.0
  %572 = vmatprep.subr.mxu0 0.0
  %573 = vmatpush2.xpose.msra.mxu0 0.0
  %574 = vmatprep.subr.mxu0 0.0
  %575 = vmatpush2.xpose.msra.mxu0 0.0
  %576 = vmatprep.subr.mxu0 0.0
  %577 = vmatpush2.xpose.msra.mxu0 0.0
  %578 = vmatprep.subr.mxu0 0.0
  %579 = vmatpush2.xpose.msra.mxu0 0.0
  %580 = vmatprep.subr.mxu0 0.0
  %581 = vmatpush2.xpose.msra.mxu0 0.0
  %582 = vmatprep.subr.mxu0 0.0
  %583 = vmatpush2.xpose.msra.mxu0 0.0
  %584 = vmatprep.subr.mxu0 0.0
  %585 = vmatpush2.xpose.msra.mxu0 0.0
  %586 = vmatprep.subr.mxu0 0.0
  %587 = vmatpush2.xpose.msra.mxu0 0.0
  %588 = vmatprep.subr.mxu0 0.0
  %589 = vmatpush2.xpose.msra.mxu0 0.0
  %590 = vmatprep.subr.mxu0 0.0
  %591 = vmatpush2.xpose.msra.mxu0 0.0
  %592 = vmatprep.subr.mxu0 0.0
  %593 = vmatpush2.xpose.msra.mxu0 0.0
  %594 = vmatprep.subr.mxu0 0.0
  %595 = vmatpush2.xpose.msra.mxu0 0.0
  %596 = vmatprep.subr.mxu0 0.0
  %597 = vmatpush2.xpose.msra.mxu0 0.0
  %598 = vmatprep.mubr.f32.mxu0 %v21
  %599 = vmatmul.mubr.f32.gmra.mxu0 %v20
  %v600 = vpop.f32.mrf.mxu0
  %v601 = vadd.f32 %v526, %v600
  %v602 = vpop.f32.mrf.mxu0
  %603 = vmatprep.mubr.f32.mxu0 %v37
  %604 = vmatmul.mubr.f32.gmra.mxu0 %v36
  %v605 = vpop.f32.mrf.mxu0
  %v606 = vadd.f32 %v531, %v605
  %v607 = vpop.f32.mrf.mxu0
  %608 = vdwg.mxu0
  %609 = vmatprep.subr.mxu0 %v295
  %610 = vmatpush1.xpose.msra.mxu0 %v294
  %611 = vmatprep.subr.mxu0 %v279
  %612 = vmatpush1.xpose.msra.mxu0 %v278
  %613 = vmatprep.subr.mxu0 %v263
  %614 = vmatpush1.xpose.msra.mxu0 %v262
  %615 = vmatprep.subr.mxu0 %v247
  %616 = vmatpush1.xpose.msra.mxu0 %v246
  %617 = vmatprep.subr.mxu0 %v231
  %618 = vmatpush1.xpose.msra.mxu0 %v230
  %619 = vmatprep.subr.mxu0 %v215
  %620 = vmatpush1.xpose.msra.mxu0 %v214
  %621 = vmatprep.subr.mxu0 %v199
  %622 = vmatpush1.xpose.msra.mxu0 %v198
  %623 = vmatprep.subr.mxu0 %v183
  %624 = vmatpush1.xpose.msra.mxu0 %v182
  %625 = vmatprep.subr.mxu0 %v167
  %626 = vmatpush1.xpose.msra.mxu0 %v166
  %627 = vmatprep.subr.mxu0 %v151
  %628 = vmatpush1.xpose.msra.mxu0 %v150
  %629 = vmatprep.subr.mxu0 %v135
  %630 = vmatpush1.xpose.msra.mxu0 %v134
  %631 = vmatprep.subr.mxu0 %v119
  %632 = vmatpush1.xpose.msra.mxu0 %v118
  %633 = vmatprep.subr.mxu0 %v103
  %634 = vmatpush1.xpose.msra.mxu0 %v102
  %635 = vmatprep.subr.mxu0 %v87
  %636 = vmatpush1.xpose.msra.mxu0 %v86
  %637 = vmatprep.subr.mxu0 %v71
  %638 = vmatpush1.xpose.msra.mxu0 %v70
  %639 = vmatprep.subr.mxu0 %v55
  %640 = vmatpush1.xpose.msra.mxu0 %v54
  %641 = vmatprep.subr.mxu0 0.0
  %642 = vmatpush2.xpose.msra.mxu0 0.0
  %643 = vmatprep.subr.mxu0 0.0
  %644 = vmatpush2.xpose.msra.mxu0 0.0
  %645 = vmatprep.subr.mxu0 0.0
  %646 = vmatpush2.xpose.msra.mxu0 0.0
  %647 = vmatprep.subr.mxu0 0.0
  %648 = vmatpush2.xpose.msra.mxu0 0.0
  %649 = vmatprep.subr.mxu0 0.0
  %650 = vmatpush2.xpose.msra.mxu0 0.0
  %651 = vmatprep.subr.mxu0 0.0
  %652 = vmatpush2.xpose.msra.mxu0 0.0
  %653 = vmatprep.subr.mxu0 0.0
  %654 = vmatpush2.xpose.msra.mxu0 0.0
  %655 = vmatprep.subr.mxu0 0.0
  %656 = vmatpush2.xpose.msra.mxu0 0.0
  %657 = vmatprep.subr.mxu0 0.0
  %658 = vmatpush2.xpose.msra.mxu0 0.0
  %659 = vmatprep.subr.mxu0 0.0
  %660 = vmatpush2.xpose.msra.mxu0 0.0
  %661 = vmatprep.subr.mxu0 0.0
  %662 = vmatpush2.xpose.msra.mxu0 0.0
  %663 = vmatprep.subr.mxu0 0.0
  %664 = vmatpush2.xpose.msra.mxu0 0.0
  %665 = vmatprep.subr.mxu0 0.0
  %666 = vmatpush2.xpose.msra.mxu0 0.0
  %667 = vmatprep.subr.mxu0 0.0
  %668 = vmatpush2.xpose.msra.mxu0 0.0
  %669 = vmatprep.subr.mxu0 0.0
  %670 = vmatpush2.xpose.msra.mxu0 0.0
  %671 = vmatprep.subr.mxu0 0.0
  %672 = vmatpush2.xpose.msra.mxu0 0.0
  %673 = vmatprep.mubr.f32.mxu0 %v23
  %674 = vmatmul.mubr.f32.gmra.mxu0 %v22
  %v675 = vpop.f32.mrf.mxu0
  %v676 = vadd.f32 %v601, %v675
  %v677 = vpop.f32.mrf.mxu0
  %678 = vmatprep.mubr.f32.mxu0 %v39
  %679 = vmatmul.mubr.f32.gmra.mxu0 %v38
  %v680 = vpop.f32.mrf.mxu0
  %v681 = vadd.f32 %v606, %v680
  %v682 = vpop.f32.mrf.mxu0
  %683 = vdwg.mxu0
  %684 = vmatprep.subr.mxu0 %v297
  %685 = vmatpush1.xpose.msra.mxu0 %v296
  %686 = vmatprep.subr.mxu0 %v281
  %687 = vmatpush1.xpose.msra.mxu0 %v280
  %688 = vmatprep.subr.mxu0 %v265
  %689 = vmatpush1.xpose.msra.mxu0 %v264
  %690 = vmatprep.subr.mxu0 %v249
  %691 = vmatpush1.xpose.msra.mxu0 %v248
  %692 = vmatprep.subr.mxu0 %v233
  %693 = vmatpush1.xpose.msra.mxu0 %v232
  %694 = vmatprep.subr.mxu0 %v217
  %695 = vmatpush1.xpose.msra.mxu0 %v216
  %696 = vmatprep.subr.mxu0 %v201
  %697 = vmatpush1.xpose.msra.mxu0 %v200
  %698 = vmatprep.subr.mxu0 %v185
  %699 = vmatpush1.xpose.msra.mxu0 %v184
  %700 = vmatprep.subr.mxu0 %v169
  %701 = vmatpush1.xpose.msra.mxu0 %v168
  %702 = vmatprep.subr.mxu0 %v153
  %703 = vmatpush1.xpose.msra.mxu0 %v152
  %704 = vmatprep.subr.mxu0 %v137
  %705 = vmatpush1.xpose.msra.mxu0 %v136
  %706 = vmatprep.subr.mxu0 %v121
  %707 = vmatpush1.xpose.msra.mxu0 %v120
  %708 = vmatprep.subr.mxu0 %v105
  %709 = vmatpush1.xpose.msra.mxu0 %v104
  %710 = vmatprep.subr.mxu0 %v89
  %711 = vmatpush1.xpose.msra.mxu0 %v88
  %712 = vmatprep.subr.mxu0 %v73
  %713 = vmatpush1.xpose.msra.mxu0 %v72
  %714 = vmatprep.subr.mxu0 %v57
  %715 = vmatpush1.xpose.msra.mxu0 %v56
  %716 = vmatprep.subr.mxu0 0.0
  %717 = vmatpush2.xpose.msra.mxu0 0.0
  %718 = vmatprep.subr.mxu0 0.0
  %719 = vmatpush2.xpose.msra.mxu0 0.0
  %720 = vmatprep.subr.mxu0 0.0
  %721 = vmatpush2.xpose.msra.mxu0 0.0
  %722 = vmatprep.subr.mxu0 0.0
  %723 = vmatpush2.xpose.msra.mxu0 0.0
  %724 = vmatprep.subr.mxu0 0.0
  %725 = vmatpush2.xpose.msra.mxu0 0.0
  %726 = vmatprep.subr.mxu0 0.0
  %727 = vmatpush2.xpose.msra.mxu0 0.0
  %728 = vmatprep.subr.mxu0 0.0
  %729 = vmatpush2.xpose.msra.mxu0 0.0
  %730 = vmatprep.subr.mxu0 0.0
  %731 = vmatpush2.xpose.msra.mxu0 0.0
  %732 = vmatprep.subr.mxu0 0.0
  %733 = vmatpush2.xpose.msra.mxu0 0.0
  %734 = vmatprep.subr.mxu0 0.0
  %735 = vmatpush2.xpose.msra.mxu0 0.0
  %736 = vmatprep.subr.mxu0 0.0
  %737 = vmatpush2.xpose.msra.mxu0 0.0
  %738 = vmatprep.subr.mxu0 0.0
  %739 = vmatpush2.xpose.msra.mxu0 0.0
  %740 = vmatprep.subr.mxu0 0.0
  %741 = vmatpush2.xpose.msra.mxu0 0.0
  %742 = vmatprep.subr.mxu0 0.0
  %743 = vmatpush2.xpose.msra.mxu0 0.0
  %744 = vmatprep.subr.mxu0 0.0
  %745 = vmatpush2.xpose.msra.mxu0 0.0
  %746 = vmatprep.subr.mxu0 0.0
  %747 = vmatpush2.xpose.msra.mxu0 0.0
  %748 = vmatprep.mubr.f32.mxu0 %v25
  %749 = vmatmul.mubr.f32.gmra.mxu0 %v24
  %v750 = vpop.f32.mrf.mxu0
  %v751 = vadd.f32 %v676, %v750
  %v752 = vpop.f32.mrf.mxu0
  %753 = vmatprep.mubr.f32.mxu0 %v41
  %754 = vmatmul.mubr.f32.gmra.mxu0 %v40
  %v755 = vpop.f32.mrf.mxu0
  %v756 = vadd.f32 %v681, %v755
  %v757 = vpop.f32.mrf.mxu0
  %758 = vdwg.mxu0
  %759 = vmatprep.subr.mxu0 %v299
  %760 = vmatpush1.xpose.msra.mxu0 %v298
  %761 = vmatprep.subr.mxu0 %v283
  %762 = vmatpush1.xpose.msra.mxu0 %v282
  %763 = vmatprep.subr.mxu0 %v267
  %764 = vmatpush1.xpose.msra.mxu0 %v266
  %765 = vmatprep.subr.mxu0 %v251
  %766 = vmatpush1.xpose.msra.mxu0 %v250
  %767 = vmatprep.subr.mxu0 %v235
  %768 = vmatpush1.xpose.msra.mxu0 %v234
  %769 = vmatprep.subr.mxu0 %v219
  %770 = vmatpush1.xpose.msra.mxu0 %v218
  %771 = vmatprep.subr.mxu0 %v203
  %772 = vmatpush1.xpose.msra.mxu0 %v202
  %773 = vmatprep.subr.mxu0 %v187
  %774 = vmatpush1.xpose.msra.mxu0 %v186
  %775 = vmatprep.subr.mxu0 %v171
  %776 = vmatpush1.xpose.msra.mxu0 %v170
  %777 = vmatprep.subr.mxu0 %v155
  %778 = vmatpush1.xpose.msra.mxu0 %v154
  %779 = vmatprep.subr.mxu0 %v139
  %780 = vmatpush1.xpose.msra.mxu0 %v138
  %781 = vmatprep.subr.mxu0 %v123
  %782 = vmatpush1.xpose.msra.mxu0 %v122
  %783 = vmatprep.subr.mxu0 %v107
  %784 = vmatpush1.xpose.msra.mxu0 %v106
  %785 = vmatprep.subr.mxu0 %v91
  %786 = vmatpush1.xpose.msra.mxu0 %v90
  %787 = vmatprep.subr.mxu0 %v75
  %788 = vmatpush1.xpose.msra.mxu0 %v74
  %789 = vmatprep.subr.mxu0 %v59
  %790 = vmatpush1.xpose.msra.mxu0 %v58
  %791 = vmatprep.subr.mxu0 0.0
  %792 = vmatpush2.xpose.msra.mxu0 0.0
  %793 = vmatprep.subr.mxu0 0.0
  %794 = vmatpush2.xpose.msra.mxu0 0.0
  %795 = vmatprep.subr.mxu0 0.0
  %796 = vmatpush2.xpose.msra.mxu0 0.0
  %797 = vmatprep.subr.mxu0 0.0
  %798 = vmatpush2.xpose.msra.mxu0 0.0
  %799 = vmatprep.subr.mxu0 0.0
  %800 = vmatpush2.xpose.msra.mxu0 0.0
  %801 = vmatprep.subr.mxu0 0.0
  %802 = vmatpush2.xpose.msra.mxu0 0.0
  %803 = vmatprep.subr.mxu0 0.0
  %804 = vmatpush2.xpose.msra.mxu0 0.0
  %805 = vmatprep.subr.mxu0 0.0
  %806 = vmatpush2.xpose.msra.mxu0 0.0
  %807 = vmatprep.subr.mxu0 0.0
  %808 = vmatpush2.xpose.msra.mxu0 0.0
  %809 = vmatprep.subr.mxu0 0.0
  %810 = vmatpush2.xpose.msra.mxu0 0.0
  %811 = vmatprep.subr.mxu0 0.0
  %812 = vmatpush2.xpose.msra.mxu0 0.0
  %813 = vmatprep.subr.mxu0 0.0
  %814 = vmatpush2.xpose.msra.mxu0 0.0
  %815 = vmatprep.subr.mxu0 0.0
  %816 = vmatpush2.xpose.msra.mxu0 0.0
  %817 = vmatprep.subr.mxu0 0.0
  %818 = vmatpush2.xpose.msra.mxu0 0.0
  %819 = vmatprep.subr.mxu0 0.0
  %820 = vmatpush2.xpose.msra.mxu0 0.0
  %821 = vmatprep.subr.mxu0 0.0
  %822 = vmatpush2.xpose.msra.mxu0 0.0
  %823 = vmatprep.mubr.f32.mxu0 %v27
  %824 = vmatmul.mubr.f32.gmra.mxu0 %v26
  %v825 = vpop.f32.mrf.mxu0
  %v826 = vadd.f32 %v751, %v825
  %v827 = vpop.f32.mrf.mxu0
  %828 = vmatprep.mubr.f32.mxu0 %v43
  %829 = vmatmul.mubr.f32.gmra.mxu0 %v42
  %v830 = vpop.f32.mrf.mxu0
  %v831 = vadd.f32 %v756, %v830
  %v832 = vpop.f32.mrf.mxu0
  %833 = vdwg.mxu0
  %834 = vmatprep.subr.mxu0 %v301
  %835 = vmatpush1.xpose.msra.mxu0 %v300
  %836 = vmatprep.subr.mxu0 %v285
  %837 = vmatpush1.xpose.msra.mxu0 %v284
  %838 = vmatprep.subr.mxu0 %v269
  %839 = vmatpush1.xpose.msra.mxu0 %v268
  %840 = vmatprep.subr.mxu0 %v253
  %841 = vmatpush1.xpose.msra.mxu0 %v252
  %842 = vmatprep.subr.mxu0 %v237
  %843 = vmatpush1.xpose.msra.mxu0 %v236
  %844 = vmatprep.subr.mxu0 %v221
  %845 = vmatpush1.xpose.msra.mxu0 %v220
  %846 = vmatprep.subr.mxu0 %v205
  %847 = vmatpush1.xpose.msra.mxu0 %v204
  %848 = vmatprep.subr.mxu0 %v189
  %849 = vmatpush1.xpose.msra.mxu0 %v188
  %850 = vmatprep.subr.mxu0 %v173
  %851 = vmatpush1.xpose.msra.mxu0 %v172
  %852 = vmatprep.subr.mxu0 %v157
  %853 = vmatpush1.xpose.msra.mxu0 %v156
  %854 = vmatprep.subr.mxu0 %v141
  %855 = vmatpush1.xpose.msra.mxu0 %v140
  %856 = vmatprep.subr.mxu0 %v125
  %857 = vmatpush1.xpose.msra.mxu0 %v124
  %858 = vmatprep.subr.mxu0 %v109
  %859 = vmatpush1.xpose.msra.mxu0 %v108
  %860 = vmatprep.subr.mxu0 %v93
  %861 = vmatpush1.xpose.msra.mxu0 %v92
  %862 = vmatprep.subr.mxu0 %v77
  %863 = vmatpush1.xpose.msra.mxu0 %v76
  %864 = vmatprep.subr.mxu0 %v61
  %865 = vmatpush1.xpose.msra.mxu0 %v60
  %866 = vmatprep.subr.mxu0 0.0
  %867 = vmatpush2.xpose.msra.mxu0 0.0
  %868 = vmatprep.subr.mxu0 0.0
  %869 = vmatpush2.xpose.msra.mxu0 0.0
  %870 = vmatprep.subr.mxu0 0.0
  %871 = vmatpush2.xpose.msra.mxu0 0.0
  %872 = vmatprep.subr.mxu0 0.0
  %873 = vmatpush2.xpose.msra.mxu0 0.0
  %874 = vmatprep.subr.mxu0 0.0
  %875 = vmatpush2.xpose.msra.mxu0 0.0
  %876 = vmatprep.subr.mxu0 0.0
  %877 = vmatpush2.xpose.msra.mxu0 0.0
  %878 = vmatprep.subr.mxu0 0.0
  %879 = vmatpush2.xpose.msra.mxu0 0.0
  %880 = vmatprep.subr.mxu0 0.0
  %881 = vmatpush2.xpose.msra.mxu0 0.0
  %882 = vmatprep.subr.mxu0 0.0
  %883 = vmatpush2.xpose.msra.mxu0 0.0
  %884 = vmatprep.subr.mxu0 0.0
  %885 = vmatpush2.xpose.msra.mxu0 0.0
  %886 = vmatprep.subr.mxu0 0.0
  %887 = vmatpush2.xpose.msra.mxu0 0.0
  %888 = vmatprep.subr.mxu0 0.0
  %889 = vmatpush2.xpose.msra.mxu0 0.0
  %890 = vmatprep.subr.mxu0 0.0
  %891 = vmatpush2.xpose.msra.mxu0 0.0
  %892 = vmatprep.subr.mxu0 0.0
  %893 = vmatpush2.xpose.msra.mxu0 0.0
  %894 = vmatprep.subr.mxu0 0.0
  %895 = vmatpush2.xpose.msra.mxu0 0.0
  %896 = vmatprep.subr.mxu0 0.0
  %897 = vmatpush2.xpose.msra.mxu0 0.0
  %898 = vmatprep.mubr.f32.mxu0 %v29
  %899 = vmatmul.mubr.f32.gmra.mxu0 %v28
  %v900 = vpop.f32.mrf.mxu0
  %v901 = vadd.f32 %v826, %v900
  %v902 = vpop.f32.mrf.mxu0
  %903 = vmatprep.mubr.f32.mxu0 %v45
  %904 = vmatmul.mubr.f32.gmra.mxu0 %v44
  %v905 = vpop.f32.mrf.mxu0
  %v906 = vadd.f32 %v831, %v905
  %v907 = vpop.f32.mrf.mxu0
  %908 = vdwg.mxu0
  %909 = vst [vmem:[%s3] sm:$0xff] %v901
  %910 = vst [vmem:[%s3 + $0x8] sm:$0xff] %v906
  // Predicated region
  $region14: #{patch_embedding_forward.1} parent=0 // pred_check
    _
  $region15: #{patch_embedding_forward.1} parent=0 // pred_check_branch
    %912 = sbr.rel (0) target = $region17
  $region16: #{patch_embedding_forward.1} parent=0 // pred_region
    _
  $region17: #{patch_embedding_forward.1} parent=0 // pred_fallthru
    _
  // Predicated region
  $region18: #{patch_embedding_forward.1} parent=0 // pred_check
    _
  $region19: #{patch_embedding_forward.1} parent=0 // pred_check_branch
    %914 = sbr.rel (0) target = $region21
  $region20: #{patch_embedding_forward.1} parent=0 // pred_region
    _
  $region21: #{patch_embedding_forward.1} parent=0 // pred_fallthru
    _

</llo_original>
